<compile_context>
chip_gen: v6e
topology: v6e:2x2x1
jax: 0.10.0
libtpu: 0.0.40
codegen_flags: <defaults>
</compile_context>

<pallas_src>
import math

import jax
import jax.numpy as jnp
from jax import lax
from jax.experimental import pallas as pl
from jax.experimental.pallas import tpu as pltpu

IN_FEATURES = 561
OUT_FEATURES = 6

_LANE = 128
_SUBLANE = 8


def _round_up(n, m):
    return ((n + m - 1) // m) * m


_IN_PAD = _round_up(IN_FEATURES, _LANE)                    # 640 lanes
_X_ROW_BYTES = _IN_PAD * 4                                 # padded f32 bytes per x row
_YT_COL_BYTES = _round_up(OUT_FEATURES, _SUBLANE) * 4      # padded f32 bytes per logits column

# VMEM budgets chosen to be safe on every generation:
#   v5e/v6e: 128 MiB physical (16 / 32 MiB default scoped limit)
#   v7x    : 64 MiB physical  (32 MiB default scoped limit)
_VMEM_LIMIT_BYTES = 32 * 1024 * 1024
_SINGLE_BLOCK_BUDGET = 20 * 1024 * 1024    # one resident x block (no pipelining)
_TILED_BUDGET = 28 * 1024 * 1024           # double-buffered x tile + logits tile
_DEFAULT_BATCH_TILE = 4096


def _single_block_max_rows():
    per_row = _X_ROW_BYTES + 2 * _YT_COL_BYTES
    return _SINGLE_BLOCK_BUDGET // per_row


def _max_batch_tile():
    per_row = 2 * _X_ROW_BYTES + 2 * _YT_COL_BYTES   # double-buffered x + logits tiles
    tb = _TILED_BUDGET // per_row
    return max(_LANE, (tb // _LANE) * _LANE)


def _logits_t(x_ref, w_ref):
    # w:(OUT, IN) lane-dense, x:(tb, IN).  Contract the shared last axis on the MXU
    # (W @ X^T, "rhs transposed" form — no explicit transpose of either operand) and
    # produce the logits already transposed: (OUT, tb), lane-dense along the batch.
    return lax.dot_general(
        w_ref[...], x_ref[...],
        dimension_numbers=(((1,), (1,)), ((), ())),
        preferred_element_type=jnp.float32,
    )


def lr_single_block_kernel(x_ref, w_ref, o_ref):
    # Whole batch resident: one MXU matmul + dim-0 (batch-axis) log_softmax, computed
    # in the transposed (OUT, B) layout so the output store is lane-dense.
    yt = _logits_t(x_ref, w_ref)                          # (OUT, B)
    m = jnp.max(yt, axis=1, keepdims=True)
    z = yt - m
    lse = jnp.log(jnp.sum(jnp.exp(z), axis=1, keepdims=True))
    o_ref[...] = (z - lse).astype(o_ref.dtype)


def make_lr_stats_kernel(batch, batch_tile):
    def lr_stats_kernel(x_ref, w_ref, yt_ref, m_ref, l_ref):
        i = pl.program_id(0)

        @pl.when(i == 0)
        def _():
            m_ref[...] = jnp.full(m_ref.shape, -jnp.inf, m_ref.dtype)
            l_ref[...] = jnp.zeros(l_ref.shape, l_ref.dtype)

        yt = _logits_t(x_ref, w_ref)                      # (OUT, tb), lane-dense
        yt_ref[...] = yt.astype(yt_ref.dtype)             # stored: pass 2 never re-reads x

        # Ragged-tail masking: columns >= batch in the last tile are garbage reads.
        col = i * batch_tile + lax.broadcasted_iota(jnp.int32, yt.shape, 1)
        valid = col < batch

        m_old = m_ref[...]
        m_new = jnp.maximum(
            m_old, jnp.max(jnp.where(valid, yt, -jnp.inf), axis=1, keepdims=True))
        p = jnp.where(valid, jnp.exp(yt - m_new), 0.0)
        l_ref[...] = l_ref[...] * jnp.exp(m_old - m_new) + jnp.sum(p, axis=1, keepdims=True)
        m_ref[...] = m_new

    return lr_stats_kernel


def lr_finalize_kernel(yt_ref, m_ref, l_ref, o_ref):
    # Pass 2: elementwise normalize of the stored lane-dense logits (no x re-read,
    # no second matmul).  Out-of-bound lanes of the ragged tail are dropped by Pallas.
    o_ref[...] = (yt_ref[...] - m_ref[...] - jnp.log(l_ref[...])).astype(o_ref.dtype)


def _lr_forward_single(x, weight):
    B, IN = x.shape
    OUT = weight.shape[0]
    cost = pl.CostEstimate(
        flops=2 * B * IN * OUT,
        transcendentals=B * OUT,
        bytes_accessed=(B * IN + B * OUT + OUT * IN) * 4,
    )
    return pl.pallas_call(
        lr_single_block_kernel,
        out_shape=jax.ShapeDtypeStruct((OUT, B), jnp.float32),
        in_specs=[
            pl.BlockSpec((B, IN), lambda: (0, 0)),
            pl.BlockSpec((OUT, IN), lambda: (0, 0)),
        ],
        out_specs=pl.BlockSpec((OUT, B), lambda: (0, 0)),
        compiler_params=pltpu.CompilerParams(vmem_limit_bytes=_VMEM_LIMIT_BYTES),
        cost_estimate=cost,
    )(x, weight)


def _lr_forward_tiled(x, weight, batch_tile):
    B, IN = x.shape
    OUT = weight.shape[0]
    tb = batch_tile
    nb = pl.cdiv(B, tb)

    x_spec = pl.BlockSpec((tb, IN), lambda i: (i, 0))
    w_spec = pl.BlockSpec((OUT, IN), lambda i: (0, 0))
    yt_spec = pl.BlockSpec((OUT, tb), lambda i: (0, i))
    stat_spec = pl.BlockSpec((OUT, 1), lambda i: (0, 0))

    # Pass 1: online per-column (dim-0) max / sum-exp over batch tiles, plus the logits
    # themselves (lane-dense (OUT, B)) so pass 2 never touches x again.
    # TODO(synk): on v7x, shard this pass over the 2 TensorCores with a leading
    # "parallel" axis and per-core partial (m, l) combined before pass 2.
    cost1 = pl.CostEstimate(
        flops=2 * B * IN * OUT,
        transcendentals=B * OUT,
        bytes_accessed=(B * IN + B * OUT + OUT * IN + 2 * OUT) * 4,
    )
    yt, m, l = pl.pallas_call(
        make_lr_stats_kernel(B, tb),
        out_shape=(jax.ShapeDtypeStruct((OUT, B), jnp.float32),
                   jax.ShapeDtypeStruct((OUT, 1), jnp.float32),
                   jax.ShapeDtypeStruct((OUT, 1), jnp.float32)),
        grid=(nb,),
        in_specs=[x_spec, w_spec],
        out_specs=(yt_spec, stat_spec, stat_spec),
        compiler_params=pltpu.CompilerParams(
            dimension_semantics=("arbitrary",),
            vmem_limit_bytes=_VMEM_LIMIT_BYTES,
        ),
        cost_estimate=cost1,
    )(x, weight)

    # Pass 2: reads ~24 B/row (stored logits) instead of re-streaming 2.2 KB/row of x.
    cost2 = pl.CostEstimate(
        flops=2 * B * OUT,
        transcendentals=OUT * nb,
        bytes_accessed=(2 * B * OUT + 2 * OUT) * 4,
    )
    return pl.pallas_call(
        lr_finalize_kernel,
        out_shape=jax.ShapeDtypeStruct((OUT, B), jnp.float32),
        grid=(nb,),
        in_specs=[yt_spec, stat_spec, stat_spec],
        out_specs=yt_spec,
        compiler_params=pltpu.CompilerParams(
            dimension_semantics=("parallel",),
            vmem_limit_bytes=_VMEM_LIMIT_BYTES,
        ),
        cost_estimate=cost2,
    )(yt, m, l)


def lr_forward(x, weight, bias=None, *, batch_tile=None, force_tiled=False):
    """Forward of LR: log_softmax(x @ W^T + b, dim=0).

    x: (B, 561) f32, weight: (6, 561) f32 (lane-dense, NOT pre-transposed),
    bias: (6,) f32 — accepted for interface parity but never DMA'd: a per-column
    constant is exactly cancelled by the dim-0 (batch-axis) log_softmax.
    Kernels compute in the transposed (6, B) layout so every HBM store is
    lane-dense; the final (B, 6) is a tiny wrapper-side transpose.
    """
    del bias
    B = x.shape[0]
    if batch_tile is None:
        batch_tile = _DEFAULT_BATCH_TILE
    batch_tile = max(_LANE, (min(batch_tile, _max_batch_tile()) // _LANE) * _LANE)

    if not force_tiled and B <= _single_block_max_rows():
        out_t = _lr_forward_single(x, weight)
    else:
        out_t = _lr_forward_tiled(x, weight, batch_tile)
    return out_t.T


def reference_forward(x, weight, bias):
    y = x @ weight.T + bias
    return jax.nn.log_softmax(y, axis=0)


if __name__ == "__main__":
    key = jax.random.PRNGKey(0)
    k_x, k_w, k_b, k_x2 = jax.random.split(key, 4)

    bound = 1.0 / math.sqrt(IN_FEATURES)  # mimics nn.Linear's U(-1/sqrt(in), 1/sqrt(in))
    weight = jax.random.uniform(k_w, (OUT_FEATURES, IN_FEATURES), jnp.float32, -bound, bound)
    bias = jax.random.uniform(k_b, (OUT_FEATURES,), jnp.float32, -bound, bound)

    # Small batch: single resident block path.
    B_small = 8
    x_small = jax.random.normal(k_x, (B_small, IN_FEATURES), jnp.float32)
    out_small = jax.block_until_ready(lr_forward(x_small, weight, bias))
    ref_small = reference_forward(x_small, weight, bias)
    assert out_small.shape == (B_small, OUT_FEATURES)
    assert jnp.allclose(out_small, ref_small, atol=1e-5, rtol=1e-5), "single-block mismatch"

    # Forced tiled path with a ragged tail (B not a multiple of the tile): exercises the
    # masked online dim-0 softmax, the stored-logits pass 2, and the lane-dense stores.
    B_ragged, tb = 300, 128
    x_ragged = jax.random.normal(k_x2, (B_ragged, IN_FEATURES), jnp.float32)
    out_ragged = jax.block_until_ready(
        lr_forward(x_ragged, weight, bias, batch_tile=tb, force_tiled=True))
    ref_ragged = reference_forward(x_ragged, weight, bias)
    assert out_ragged.shape == (B_ragged, OUT_FEATURES)
    assert jnp.allclose(out_ragged, ref_ragged, atol=2e-5, rtol=2e-5), "tiled-batch mismatch"

    print("KERNEL_OK")
</pallas_src>

<mosaic_0001>
module attributes {stable_mosaic.version = 11 : i64} {
  func.func @lr_single_block_kernel(%arg0: memref<8x561xf32, #tpu.memory_space<vmem>>, %arg1: memref<6x561xf32, #tpu.memory_space<vmem>>, %arg2: memref<6x8xf32, #tpu.memory_space<vmem>>) attributes {dimension_semantics = [], scalar_prefetch = 0 : i64, scratch_operands = 0 : i64, tpu.core_type = #tpu.core_type<tc>} {
    %c0 = arith.constant 0 : index
    %c0_0 = arith.constant 0 : index
    %0 = vector.load %arg1[%c0, %c0_0] : memref<6x561xf32, #tpu.memory_space<vmem>>, vector<6x561xf32>
    %c0_1 = arith.constant 0 : index
    %c0_2 = arith.constant 0 : index
    %1 = vector.load %arg0[%c0_1, %c0_2] : memref<8x561xf32, #tpu.memory_space<vmem>>, vector<8x561xf32>
    %cst = arith.constant dense<0.000000e+00> : vector<6x8xf32>
    %2 = tpu.matmul %0, %1, %cst {dimension_numbers = #tpu.dot_dimension_numbers<[1], [1], [0], [0], [0, 0, 1, 0], [], []>} : vector<6x561xf32>, vector<8x561xf32>, vector<6x8xf32> -> vector<6x8xf32>
    %cst_3 = arith.constant dense<0xFF800000> : vector<6xf32>
    %3 = vector.multi_reduction <maximumf>, %2, %cst_3 [1] : vector<6x8xf32> to vector<6xf32>
    %4 = vector.shape_cast %3 : vector<6xf32> to vector<6x1xf32>
    %5 = vector.broadcast %4 : vector<6x1xf32> to vector<6x8xf32>
    %6 = arith.subf %2, %5 : vector<6x8xf32>
    %7 = math.exp %6 : vector<6x8xf32>
    %cst_4 = arith.constant dense<0.000000e+00> : vector<6xf32>
    %8 = vector.multi_reduction <add>, %7, %cst_4 [1] : vector<6x8xf32> to vector<6xf32>
    %9 = vector.shape_cast %8 : vector<6xf32> to vector<6x1xf32>
    %10 = math.log %9 : vector<6x1xf32>
    %11 = vector.broadcast %10 : vector<6x1xf32> to vector<6x8xf32>
    %12 = arith.subf %6, %11 : vector<6x8xf32>
    %c0_5 = arith.constant 0 : index
    %c0_6 = arith.constant 0 : index
    %13 = vector.load %arg2[%c0_5, %c0_6] : memref<6x8xf32, #tpu.memory_space<vmem>>, vector<6x8xf32>
    tpu.vector_store %arg2[%c0_5, %c0_6], %12 {strides = array<i32>} : memref<6x8xf32, #tpu.memory_space<vmem>>, vector<6x8xf32>,
    return
  }
}

</mosaic_0001>

<llo_original>
// kernel: tpu_custom_call.1
$region0: #{tpu_custom_call.1}
  #allocation0 [shape = 'u32[]', space=smem, size = 0x4, offset = 0x4, fixed_abs, tag = 'smem constant byte address 0x4 - core index']
  #allocation1 [shape = 'u32[144,128]{1,0:T(1,128)}', space=vmem, size = 0x12000, scoped, tag = 'internal scratch']
  %s0 = inlined_call_operand.hbm [shape: f32[8,561], index: 0, kind: input, shape index: {}]
  %s1 = inlined_call_operand.hbm [shape: f32[6,561], index: 1, kind: input, shape index: {}]
  %s2 = inlined_call_operand.hbm [shape: f32[6,8], index: 2, kind: output, shape index: {}]
  %s3 = sld [smem:[#allocation0]]
  $region26: #{tpu_custom_call.1} parent=0
    _
  %s5 = ssub.s32 1, %s3
  %s6 = scalar_select 0, %s5, %s3
  $region1: #{tpu_custom_call.1} parent=0
    #allocation2 [shape = 'u8[20480]{0}', space=vmem, size = 0x5000, scoped, tag = 'input window, operand 0, single buffered']
    #allocation3 [shape = 's32[1]{0}', space=sflag, size = 0x4, scoped, tag = 'scoped memory for tpu_custom_call.1']
    #allocation4 [shape = 's32[1]{0}', space=sflag, size = 0x4, scoped, tag = 'scoped memory for tpu_custom_call.1']
    #allocation5 [shape = 'u8[20480]{0}', space=vmem, size = 0x5000, scoped, tag = 'input window, operand 1, single buffered']
    #allocation6 [shape = 's32[1]{0}', space=sflag, size = 0x4, scoped, tag = 'scoped memory for tpu_custom_call.1']
    #allocation7 [shape = 'u8[4096]{0}', space=vmem, size = 0x1000, scoped, tag = 'output window, operand 0, single buffered']
    %7 = vsyncpa [#allocation3], 0
    %8 = vsyncpa [#allocation6], 0
    %9 = vsyncpa [#allocation4], 0
    // Predicated region
    $region2: #{tpu_custom_call.1} parent=1 // pred_check
      _
    $region3: #{tpu_custom_call.1} parent=1 // pred_check_branch
      %11 = sbr.rel (0) target = $region5
    $region4: #{tpu_custom_call.1} parent=1 // pred_region
      %s13 = ssub.s32 640, 640
      %14 = vsyncadd [#allocation3], %s13
      %s16 = sshll.u32 [#allocation2], 4
      %s17 = int_to_ptr.vmem [resolvable:$true] %s16
      %19 = dma.hbm_to_vmem [thread:$0]  %s0, 640, %s17, [#allocation3]
    $region5: #{tpu_custom_call.1} parent=1 // pred_fallthru
      _
    // Predicated region
    $region6: #{tpu_custom_call.1} parent=1 // pred_check
      _
    $region7: #{tpu_custom_call.1} parent=1 // pred_check_branch
      %21 = sbr.rel (0) target = $region9
    $region8: #{tpu_custom_call.1} parent=1 // pred_region
      %s23 = ssub.s32 640, 640
      %24 = vsyncadd [#allocation6], %s23
      %s26 = sshll.u32 [#allocation5], 4
      %s27 = int_to_ptr.vmem [resolvable:$true] %s26
      %29 = dma.hbm_to_vmem [thread:$0]  %s1, 640, %s27, [#allocation6]
    $region9: #{tpu_custom_call.1} parent=1 // pred_fallthru
      _
    // Predicated region
    $region10: #{tpu_custom_call.1} parent=1 // pred_check
      _
    $region11: #{tpu_custom_call.1} parent=1 // pred_check_branch
      %31 = sbr.rel (0) target = $region13
    $region12: #{tpu_custom_call.1} parent=1 // pred_region
      %32 = dma.done [#allocation3], 640
    $region13: #{tpu_custom_call.1} parent=1 // pred_fallthru
      _
    // Predicated region
    $region14: #{tpu_custom_call.1} parent=1 // pred_check
      _
    $region15: #{tpu_custom_call.1} parent=1 // pred_check_branch
      %34 = sbr.rel (0) target = $region17
    $region16: #{tpu_custom_call.1} parent=1 // pred_region
      %35 = dma.done [#allocation6], 640
    $region17: #{tpu_custom_call.1} parent=1 // pred_fallthru
      _
    %v36 = vld [vmem:[#allocation5] sm:$0x3f]
    %v37 = vld [vmem:[#allocation5 + $0x8] sm:$0x3f]
    %v38 = vld [vmem:[#allocation5 + $0x10] sm:$0x3f]
    %v39 = vld [vmem:[#allocation5 + $0x18] sm:$0x3f]
    %v40 = vld [vmem:[#allocation5 + $0x20] sm:$0x3f]
    %v41 = vld [vmem:[#allocation2] sm:$0xff]
    %v42 = vld [vmem:[#allocation2 + $0x8] sm:$0xff]
    %v43 = vld [vmem:[#allocation2 + $0x10] sm:$0xff]
    %v44 = vld [vmem:[#allocation2 + $0x18] sm:$0xff]
    %v45 = vld [vmem:[#allocation2 + $0x20] sm:$0xff]
    %vm46 = vcmask 400384
    %v48 = vsel %vm46, %v40, 0
    %v51 = vsel %vm46, %v45, 0
    %53 = vmatprep.subr.mxu0 0.0
    %54 = vmatpush1.xpose.msra.mxu0 0.0
    %55 = vmatprep.subr.mxu0 0.0
    %56 = vmatpush1.xpose.msra.mxu0 0.0
    %57 = vmatprep.subr.mxu0 0.0
    %58 = vmatpush1.xpose.msra.mxu0 0.0
    %59 = vmatprep.subr.mxu0 0.0
    %60 = vmatpush1.xpose.msra.mxu0 0.0
    %61 = vmatprep.subr.mxu0 0.0
    %62 = vmatpush1.xpose.msra.mxu0 0.0
    %63 = vmatprep.subr.mxu0 0.0
    %64 = vmatpush1.xpose.msra.mxu0 0.0
    %65 = vmatprep.subr.mxu0 0.0
    %66 = vmatpush1.xpose.msra.mxu0 0.0
    %67 = vmatprep.subr.mxu0 0.0
    %68 = vmatpush1.xpose.msra.mxu0 0.0
    %69 = vmatprep.subr.mxu0 0.0
    %70 = vmatpush1.xpose.msra.mxu0 0.0
    %71 = vmatprep.subr.mxu0 0.0
    %72 = vmatpush1.xpose.msra.mxu0 0.0
    %73 = vmatprep.subr.mxu0 0.0
    %74 = vmatpush1.xpose.msra.mxu0 0.0
    %75 = vmatprep.subr.mxu0 0.0
    %76 = vmatpush1.xpose.msra.mxu0 0.0
    %77 = vmatprep.subr.mxu0 0.0
    %78 = vmatpush1.xpose.msra.mxu0 0.0
    %79 = vmatprep.subr.mxu0 0.0
    %80 = vmatpush1.xpose.msra.mxu0 0.0
    %81 = vmatprep.subr.mxu0 0.0
    %82 = vmatpush1.xpose.msra.mxu0 0.0
    %83 = vmatprep.subr.mxu0 %v42
    %84 = vmatpush1.xpose.msra.mxu0 %v41
    %85 = vmatprep.subr.mxu0 0.0
    %86 = vmatpush2.xpose.msra.mxu0 0.0
    %87 = vmatprep.subr.mxu0 0.0
    %88 = vmatpush2.xpose.msra.mxu0 0.0
    %89 = vmatprep.subr.mxu0 0.0
    %90 = vmatpush2.xpose.msra.mxu0 0.0
    %91 = vmatprep.subr.mxu0 0.0
    %92 = vmatpush2.xpose.msra.mxu0 0.0
    %93 = vmatprep.subr.mxu0 0.0
    %94 = vmatpush2.xpose.msra.mxu0 0.0
    %95 = vmatprep.subr.mxu0 0.0
    %96 = vmatpush2.xpose.msra.mxu0 0.0
    %97 = vmatprep.subr.mxu0 0.0
    %98 = vmatpush2.xpose.msra.mxu0 0.0
    %99 = vmatprep.subr.mxu0 0.0
    %100 = vmatpush2.xpose.msra.mxu0 0.0
    %101 = vmatprep.subr.mxu0 0.0
    %102 = vmatpush2.xpose.msra.mxu0 0.0
    %103 = vmatprep.subr.mxu0 0.0
    %104 = vmatpush2.xpose.msra.mxu0 0.0
    %105 = vmatprep.subr.mxu0 0.0
    %106 = vmatpush2.xpose.msra.mxu0 0.0
    %107 = vmatprep.subr.mxu0 0.0
    %108 = vmatpush2.xpose.msra.mxu0 0.0
    %109 = vmatprep.subr.mxu0 0.0
    %110 = vmatpush2.xpose.msra.mxu0 0.0
    %111 = vmatprep.subr.mxu0 0.0
    %112 = vmatpush2.xpose.msra.mxu0 0.0
    %113 = vmatprep.subr.mxu0 0.0
    %114 = vmatpush2.xpose.msra.mxu0 0.0
    %115 = vmatprep.subr.mxu0 0.0
    %116 = vmatpush2.xpose.msra.mxu0 0.0
    %117 = vmatprep.mubr.f32.mxu0 %v37
    %118 = vmatmul.mubr.f32.gmra.mxu0 %v36
    %v119 = vpop.f32.mrf.mxu0
    %v120 = vadd.f32 0.0, %v119
    %v121 = vpop.f32.mrf.mxu0
    %122 = vdwg.mxu0
    %123 = vmatprep.subr.mxu0 0.0
    %124 = vmatpush1.xpose.msra.mxu0 0.0
    %125 = vmatprep.subr.mxu0 0.0
    %126 = vmatpush1.xpose.msra.mxu0 0.0
    %127 = vmatprep.subr.mxu0 0.0
    %128 = vmatpush1.xpose.msra.mxu0 0.0
    %129 = vmatprep.subr.mxu0 0.0
    %130 = vmatpush1.xpose.msra.mxu0 0.0
    %131 = vmatprep.subr.mxu0 0.0
    %132 = vmatpush1.xpose.msra.mxu0 0.0
    %133 = vmatprep.subr.mxu0 0.0
    %134 = vmatpush1.xpose.msra.mxu0 0.0
    %135 = vmatprep.subr.mxu0 0.0
    %136 = vmatpush1.xpose.msra.mxu0 0.0
    %137 = vmatprep.subr.mxu0 0.0
    %138 = vmatpush1.xpose.msra.mxu0 0.0
    %139 = vmatprep.subr.mxu0 0.0
    %140 = vmatpush1.xpose.msra.mxu0 0.0
    %141 = vmatprep.subr.mxu0 0.0
    %142 = vmatpush1.xpose.msra.mxu0 0.0
    %143 = vmatprep.subr.mxu0 0.0
    %144 = vmatpush1.xpose.msra.mxu0 0.0
    %145 = vmatprep.subr.mxu0 0.0
    %146 = vmatpush1.xpose.msra.mxu0 0.0
    %147 = vmatprep.subr.mxu0 0.0
    %148 = vmatpush1.xpose.msra.mxu0 0.0
    %149 = vmatprep.subr.mxu0 0.0
    %150 = vmatpush1.xpose.msra.mxu0 0.0
    %151 = vmatprep.subr.mxu0 0.0
    %152 = vmatpush1.xpose.msra.mxu0 0.0
    %153 = vmatprep.subr.mxu0 %v44
    %154 = vmatpush1.xpose.msra.mxu0 %v43
    %155 = vmatprep.subr.mxu0 0.0
    %156 = vmatpush2.xpose.msra.mxu0 0.0
    %157 = vmatprep.subr.mxu0 0.0
    %158 = vmatpush2.xpose.msra.mxu0 0.0
    %159 = vmatprep.subr.mxu0 0.0
    %160 = vmatpush2.xpose.msra.mxu0 0.0
    %161 = vmatprep.subr.mxu0 0.0
    %162 = vmatpush2.xpose.msra.mxu0 0.0
    %163 = vmatprep.subr.mxu0 0.0
    %164 = vmatpush2.xpose.msra.mxu0 0.0
    %165 = vmatprep.subr.mxu0 0.0
    %166 = vmatpush2.xpose.msra.mxu0 0.0
    %167 = vmatprep.subr.mxu0 0.0
    %168 = vmatpush2.xpose.msra.mxu0 0.0
    %169 = vmatprep.subr.mxu0 0.0
    %170 = vmatpush2.xpose.msra.mxu0 0.0
    %171 = vmatprep.subr.mxu0 0.0
    %172 = vmatpush2.xpose.msra.mxu0 0.0
    %173 = vmatprep.subr.mxu0 0.0
    %174 = vmatpush2.xpose.msra.mxu0 0.0
    %175 = vmatprep.subr.mxu0 0.0
    %176 = vmatpush2.xpose.msra.mxu0 0.0
    %177 = vmatprep.subr.mxu0 0.0
    %178 = vmatpush2.xpose.msra.mxu0 0.0
    %179 = vmatprep.subr.mxu0 0.0
    %180 = vmatpush2.xpose.msra.mxu0 0.0
    %181 = vmatprep.subr.mxu0 0.0
    %182 = vmatpush2.xpose.msra.mxu0 0.0
    %183 = vmatprep.subr.mxu0 0.0
    %184 = vmatpush2.xpose.msra.mxu0 0.0
    %185 = vmatprep.subr.mxu0 0.0
    %186 = vmatpush2.xpose.msra.mxu0 0.0
    %187 = vmatprep.mubr.f32.mxu0 %v39
    %188 = vmatmul.mubr.f32.gmra.mxu0 %v38
    %v189 = vpop.f32.mrf.mxu0
    %v190 = vadd.f32 %v120, %v189
    %v191 = vpop.f32.mrf.mxu0
    %192 = vdwg.mxu0
    %193 = vmatprep.subr.mxu0 0.0
    %194 = vmatpush1.xpose.msra.mxu0 0.0
    %195 = vmatprep.subr.mxu0 0.0
    %196 = vmatpush1.xpose.msra.mxu0 0.0
    %197 = vmatprep.subr.mxu0 0.0
    %198 = vmatpush1.xpose.msra.mxu0 0.0
    %199 = vmatprep.subr.mxu0 0.0
    %200 = vmatpush1.xpose.msra.mxu0 0.0
    %201 = vmatprep.subr.mxu0 0.0
    %202 = vmatpush1.xpose.msra.mxu0 0.0
    %203 = vmatprep.subr.mxu0 0.0
    %204 = vmatpush1.xpose.msra.mxu0 0.0
    %205 = vmatprep.subr.mxu0 0.0
    %206 = vmatpush1.xpose.msra.mxu0 0.0
    %207 = vmatprep.subr.mxu0 0.0
    %208 = vmatpush1.xpose.msra.mxu0 0.0
    %209 = vmatprep.subr.mxu0 0.0
    %210 = vmatpush1.xpose.msra.mxu0 0.0
    %211 = vmatprep.subr.mxu0 0.0
    %212 = vmatpush1.xpose.msra.mxu0 0.0
    %213 = vmatprep.subr.mxu0 0.0
    %214 = vmatpush1.xpose.msra.mxu0 0.0
    %215 = vmatprep.subr.mxu0 0.0
    %216 = vmatpush1.xpose.msra.mxu0 0.0
    %217 = vmatprep.subr.mxu0 0.0
    %218 = vmatpush1.xpose.msra.mxu0 0.0
    %219 = vmatprep.subr.mxu0 0.0
    %220 = vmatpush1.xpose.msra.mxu0 0.0
    %221 = vmatprep.subr.mxu0 0.0
    %222 = vmatpush1.xpose.msra.mxu0 0.0
    %223 = vmatprep.subr.mxu0 0.0
    %224 = vmatpush1.xpose.msra.mxu0 %v51
    %225 = vmatprep.subr.mxu0 0.0
    %226 = vmatpush2.xpose.msra.mxu0 0.0
    %227 = vmatprep.subr.mxu0 0.0
    %228 = vmatpush2.xpose.msra.mxu0 0.0
    %229 = vmatprep.subr.mxu0 0.0
    %230 = vmatpush2.xpose.msra.mxu0 0.0
    %231 = vmatprep.subr.mxu0 0.0
    %232 = vmatpush2.xpose.msra.mxu0 0.0
    %233 = vmatprep.subr.mxu0 0.0
    %234 = vmatpush2.xpose.msra.mxu0 0.0
    %235 = vmatprep.subr.mxu0 0.0
    %236 = vmatpush2.xpose.msra.mxu0 0.0
    %237 = vmatprep.subr.mxu0 0.0
    %238 = vmatpush2.xpose.msra.mxu0 0.0
    %239 = vmatprep.subr.mxu0 0.0
    %240 = vmatpush2.xpose.msra.mxu0 0.0
    %241 = vmatprep.subr.mxu0 0.0
    %242 = vmatpush2.xpose.msra.mxu0 0.0
    %243 = vmatprep.subr.mxu0 0.0
    %244 = vmatpush2.xpose.msra.mxu0 0.0
    %245 = vmatprep.subr.mxu0 0.0
    %246 = vmatpush2.xpose.msra.mxu0 0.0
    %247 = vmatprep.subr.mxu0 0.0
    %248 = vmatpush2.xpose.msra.mxu0 0.0
    %249 = vmatprep.subr.mxu0 0.0
    %250 = vmatpush2.xpose.msra.mxu0 0.0
    %251 = vmatprep.subr.mxu0 0.0
    %252 = vmatpush2.xpose.msra.mxu0 0.0
    %253 = vmatprep.subr.mxu0 0.0
    %254 = vmatpush2.xpose.msra.mxu0 0.0
    %255 = vmatprep.subr.mxu0 0.0
    %256 = vmatpush2.xpose.msra.mxu0 0.0
    %257 = vmatprep.mubr.f32.mxu0 0.0
    %258 = vmatmul.mubr.f32.gmra.mxu0 %v48
    %v259 = vpop.f32.mrf.mxu0
    %v260 = vadd.f32 %v190, %v259
    %v261 = vpop.f32.mrf.mxu0
    %262 = vdwg.mxu0
    %vm263 = vcmask 62464
    %v264 = vsel %vm263, %v260, -inf
    %265 = vmax.xlane.f32.xlu0 %v264
    %v266 = vpop.xlane.xlu0 %265
    %v267 = vsub.f32 %v260, %v266
    %v268 = vmul.f32 %v267, 1.442695
    %v269 = vpow.pop %v268
    %v270 = vsel %vm263, %v269, 0.0
    %271 = vadd.xlane.f32.xlu0 %v270
    %v272 = vpop.xlane.xlu0 %271
    %v273 = vlog2.pop %v272
    %v274 = vmul.f32 %v273, 0.6931472
    %v275 = vsub.f32 %v267, %v274
    %276 = vst.msk [vmem:[#allocation7] sm:$0x3f] %vm263, %v275
    // Predicated region
    $region18: #{tpu_custom_call.1} parent=1 // pred_check
      _
    $region19: #{tpu_custom_call.1} parent=1 // pred_check_branch
      %278 = sbr.rel (0) target = $region21
    $region20: #{tpu_custom_call.1} parent=1 // pred_region
      %s280 = ssub.s32 128, 128
      %281 = vsyncadd [#allocation4], %s280
      %s283 = sshll.u32 [#allocation7], 4
      %s284 = int_to_ptr.vmem [resolvable:$true] %s283
      %286 = dma.vmem_to_hbm [thread:$0]  %s284, 128, %s2, [#allocation4]
    $region21: #{tpu_custom_call.1} parent=1 // pred_fallthru
      _
    // Predicated region
    $region22: #{tpu_custom_call.1} parent=1 // pred_check
      _
    $region23: #{tpu_custom_call.1} parent=1 // pred_check_branch
      %288 = sbr.rel (0) target = $region25
    $region24: #{tpu_custom_call.1} parent=1 // pred_region
      %289 = dma.done [#allocation4], 128
    $region25: #{tpu_custom_call.1} parent=1 // pred_fallthru
      _
    %290 = vsyncpa [#allocation3], 1
    %291 = vsyncpa [#allocation6], 1
    %292 = vsyncpa [#allocation4], 1

</llo_original>
